<compile_context>
chip_gen: v6e
topology: v6e:2x2x1
jax: 0.10.0
libtpu: 0.0.40
codegen_flags: <defaults>
</compile_context>

<pallas_src>
import jax
import jax.numpy as jnp
from jax import lax
from jax.experimental import pallas as pl
from jax.experimental.pallas import tpu as pltpu


# ---------------------------------------------------------------------------
# Kernel
# ---------------------------------------------------------------------------
def _mlp_kernel(x_ref, w1_ref, b1_ref, w2_ref, b2_ref, w3_ref, b3_ref, o_ref):
    """Fused 3-layer MLP with batch on the lane (last) axis.

    x_ref : (TB, In)  f32  -- native input layout, cast to bf16 in-kernel
    w1_ref: (H, In)   bf16
    b1_ref: (H, 1)    f32
    w2_ref: (H, H)    bf16
    b2_ref: (H, 1)    f32
    w3_ref: (H, 1)    f32  -- fc3 weights as a column (VPU path, no MXU)
    b3_ref: (1, 1)    f32  -- SMEM scalar
    o_ref : (1, TB)   f32  -- lane-dense store
    """
    x = x_ref[...].astype(w1_ref.dtype)                         # (TB, In) -> bf16

    # fc1 + ReLU: contract In on both operands -> (H, TB); f32 accumulate.
    h1 = lax.dot_general(w1_ref[...], x, (((1,), (1,)), ((), ())),
                         preferred_element_type=jnp.float32)
    # Fused bias + ReLU + cast: only the bf16 copy of h1 is materialized.
    h1 = jnp.maximum(h1 + b1_ref[...], 0.0).astype(w2_ref.dtype)    # (H, TB) bf16

    # fc2 + ReLU (f32 elementwise; v5e-safe).
    h2 = jnp.dot(w2_ref[...], h1, preferred_element_type=jnp.float32)
    h2 = jnp.maximum(h2 + b2_ref[...], 0.0)                          # (H, TB) f32

    # fc3 off the MXU: VPU multiply + sublane reduce (XLU), then sigmoid (EUP).
    z = jnp.sum(w3_ref[...] * h2, axis=0, keepdims=True) + b3_ref[0, 0]   # (1, TB)
    o_ref[...] = jax.nn.sigmoid(z).astype(o_ref.dtype)               # prob_up


# ---------------------------------------------------------------------------
# Generation-aware tiling
# ---------------------------------------------------------------------------
def _tpu_generation_info():
    """Returns (vmem_limit_bytes to request, TensorCores per chip)."""
    kind = ""
    try:
        kind = jax.devices()[0].device_kind.lower()
    except Exception:
        pass
    if "v7" in kind or "7x" in kind:
        return 32 * 1024 * 1024, 2      # v7x: 64 MiB physical per TC, 2 TCs
    if "v2" in kind or "v3" in kind:
        return 12 * 1024 * 1024, 1      # older parts: small VMEM, be conservative
    # v5e / v6e: 128 MiB physical; raise the small default scoped limit.
    return 64 * 1024 * 1024, 1


def _choose_batch_tile(B, in_size, hidden, vmem_limit, num_cores):
    """Pick a lane-aligned batch tile from a VMEM budget. Returns (tb, padded_B)."""
    # Bytes per batch column: x tile (f32, double-buffered) + out (f32, dbuf)
    # + f32/bf16 intermediates (h1 f32 temp, h1 bf16, h2 f32, z f32).
    per_col = 2 * in_size * 4 + 2 * 4 + hidden * (4 + 2 + 4) + 4
    # Resident weights/biases (worst case double-buffered) + slack.
    fixed = 2 * ((hidden * in_size + hidden * hidden) * 2
                 + (2 * hidden + 1) * 4) + (1 << 16)
    budget = int(vmem_limit * 0.6)
    tb_cap = max(128, (budget - fixed) // per_col)
    tb_cap = max(128, min((tb_cap // 128) * 128, 32768))

    n_steps = -(-B // tb_cap)
    if num_cores > 1 and B >= num_cores * 128:
        # Keep grid length >= num TensorCores so the "parallel" axis shards.
        n_steps = max(n_steps, num_cores)
    if n_steps == 1:
        return B, B                       # single tile: block == full array dims
    tb = -(-B // n_steps)
    tb = -(-tb // 128) * 128              # lane-dense output, (8,128)-legal tile
    return tb, n_steps * tb


# ---------------------------------------------------------------------------
# pallas_call builder + wrapper
# ---------------------------------------------------------------------------
def _build_call(in_size, hidden, tb, padded, single_buffer_weights, vmem_limit):
    # Resident weights/biases never change block index; single-buffer them to
    # free VMEM for a bigger batch tile (default is double-buffering).
    resident = {"pipeline_mode": pl.Buffered(1)} if single_buffer_weights else {}
    full = lambda i: (0, 0)
    in_specs = [
        pl.BlockSpec((tb, in_size), lambda i: (i, 0)),             # x, native layout
        pl.BlockSpec((hidden, in_size), full, **resident),         # w1
        pl.BlockSpec((hidden, 1), full, **resident),               # b1
        pl.BlockSpec((hidden, hidden), full, **resident),          # w2
        pl.BlockSpec((hidden, 1), full, **resident),               # b2
        pl.BlockSpec((hidden, 1), full, **resident),               # w3 column
        pl.BlockSpec(memory_space=pltpu.MemorySpace.SMEM),         # b3 scalar
    ]
    return pl.pallas_call(
        _mlp_kernel,
        out_shape=jax.ShapeDtypeStruct((1, padded), jnp.float32),
        grid_spec=pltpu.PrefetchScalarGridSpec(
            num_scalar_prefetch=0,
            grid=(padded // tb,),
            in_specs=in_specs,
            out_specs=pl.BlockSpec((1, tb), lambda i: (0, i)),     # lane-dense
        ),
        compiler_params=pltpu.CompilerParams(
            dimension_semantics=("parallel",),
            vmem_limit_bytes=int(vmem_limit),
        ),
    )


def policy_network_forward(x, params, *, batch_tile=None,
                           compute_dtype=jnp.bfloat16):
    """x: (B, input_size) f32 -> (B, 1) f32 probabilities (same as the module).

    compute_dtype controls the MXU operand dtype for fc1/fc2 (bf16 by default,
    an intentional deviation from PyTorch f32; pass jnp.float32 for exactness).
    """
    w1, b1, w2, b2, w3, b3 = params          # PyTorch layout: w (out,in), b (out,)
    B, in_size = x.shape
    hidden = w1.shape[0]

    vmem_limit, num_cores = _tpu_generation_info()
    if batch_tile is None:
        tb, padded = _choose_batch_tile(B, in_size, hidden, vmem_limit, num_cores)
    else:
        tb = int(batch_tile)
        padded = -(-B // tb) * tb
        if padded // tb > 1:
            assert tb % 128 == 0, (
                "batch_tile must be a multiple of 128 unless it covers the whole batch")

    # x stays f32 in its native (B, In) layout: no transpose/cast HBM round trip.
    xp = x if padded == B else jnp.pad(x, ((0, padded - B), (0, 0)))

    w1c = w1.astype(compute_dtype)                         # (H, In)
    w2c = w2.astype(compute_dtype)                         # (H, H)
    b1c = b1.reshape(hidden, 1).astype(jnp.float32)
    b2c = b2.reshape(hidden, 1).astype(jnp.float32)
    w3c = w3.reshape(hidden, 1).astype(jnp.float32)        # fc3 column, f32 VPU path
    b3c = b3.reshape(1, 1).astype(jnp.float32)

    args = (xp, w1c, b1c, w2c, b2c, w3c, b3c)
    try:
        out_t = _build_call(in_size, hidden, tb, padded, True, vmem_limit)(*args)
    except Exception:
        # TODO(synk): pl.Buffered(1) single-buffering of resident weights is a
        # VMEM micro-opt; fall back to default buffering if unsupported.
        out_t = _build_call(in_size, hidden, tb, padded, False, vmem_limit)(*args)

    return out_t[0, :B].reshape(B, 1)        # back to the module's (B, 1) layout


# ---------------------------------------------------------------------------
# Init + reference
# ---------------------------------------------------------------------------
def init_params(key, input_size, hidden_size):
    """PyTorch nn.Linear-style init: U(-1/sqrt(fan_in), +1/sqrt(fan_in)), w is (out, in)."""
    def linear(k, fan_in, fan_out):
        kw, kb = jax.random.split(k)
        bound = 1.0 / jnp.sqrt(fan_in)
        w = jax.random.uniform(kw, (fan_out, fan_in), jnp.float32, -bound, bound)
        b = jax.random.uniform(kb, (fan_out,), jnp.float32, -bound, bound)
        return w, b

    k1, k2, k3 = jax.random.split(key, 3)
    w1, b1 = linear(k1, input_size, hidden_size)
    w2, b2 = linear(k2, hidden_size, hidden_size)
    w3, b3 = linear(k3, hidden_size, 1)
    return (w1, b1, w2, b2, w3, b3)


def reference_forward(x, params, match_kernel_casts=False):
    """Pure-JAX reference. match_kernel_casts mirrors the kernel's dtype choices
    (bf16 operands for fc1/fc2 with f32 accumulate, f32 fc3)."""
    w1, b1, w2, b2, w3, b3 = params

    def dense(a, w, b, cd):
        if cd is not None:
            a = a.astype(cd)
            w = w.astype(cd)
        return jnp.dot(a, w.T, preferred_element_type=jnp.float32) + b

    cd = jnp.bfloat16 if match_kernel_casts else None
    h1 = jnp.maximum(dense(x, w1, b1, cd), 0.0)
    if match_kernel_casts:
        h1 = h1.astype(jnp.bfloat16)
    h2 = jnp.maximum(dense(h1, w2, b2, cd), 0.0)
    z = dense(h2, w3, b3, None)               # kernel fc3 runs in f32 on the VPU
    return jax.nn.sigmoid(z)


# ---------------------------------------------------------------------------
# Demo / self-test
# ---------------------------------------------------------------------------
if __name__ == "__main__":
    batch, input_size, hidden_size = 8, 16, 32

    key = jax.random.PRNGKey(0)
    kx, kp = jax.random.split(key)
    x = jax.random.normal(kx, (batch, input_size), jnp.float32)
    params = init_params(kp, input_size, hidden_size)

    out = policy_network_forward(x, params)
    out = jax.block_until_ready(out)
    assert out.shape == (batch, 1)

    # Cast-consistent reference -> tight tolerance.
    ref_match = reference_forward(x, params, match_kernel_casts=True)
    assert jnp.allclose(out, ref_match, atol=2e-3, rtol=2e-3)

    # Full f32 reference (PyTorch semantics) -> loose tolerance (bf16 rounding).
    ref_f32 = reference_forward(x, params)
    assert jnp.allclose(out, ref_f32, atol=5e-2, rtol=5e-2)

    # Exercise the multi-tile + batch-padding path (grid > 1, padded B).
    kx2 = jax.random.split(kx)[0]
    x_big = jax.random.normal(kx2, (200, input_size), jnp.float32)
    out_big = jax.block_until_ready(
        policy_network_forward(x_big, params, batch_tile=128))
    ref_big = reference_forward(x_big, params, match_kernel_casts=True)
    assert out_big.shape == (200, 1)
    assert jnp.allclose(out_big, ref_big, atol=2e-3, rtol=2e-3)

    print("KERNEL_OK")
</pallas_src>

<mosaic_0001>
module attributes {stable_mosaic.version = 11 : i64} {
  func.func @_mlp_kernel(%arg0: i32, %arg1: memref<8x16xf32, #tpu.memory_space<vmem>>, %arg2: memref<32x16xbf16, #tpu.memory_space<vmem>>, %arg3: memref<32x1xf32, #tpu.memory_space<vmem>>, %arg4: memref<32x32xbf16, #tpu.memory_space<vmem>>, %arg5: memref<32x1xf32, #tpu.memory_space<vmem>>, %arg6: memref<32x1xf32, #tpu.memory_space<vmem>>, %arg7: memref<1x1xf32, #tpu.memory_space<smem>>, %arg8: memref<1x8xf32, #tpu.memory_space<vmem>>) attributes {dimension_semantics = [#tpu.dimension_semantics<parallel>], iteration_bounds = array<i64: 1>, scalar_prefetch = 0 : i64, scratch_operands = 0 : i64, tpu.core_type = #tpu.core_type<tc>, window_params = [{transform_indices = @transform_0, window_bounds = array<i64: 8, 16>}, {pipeline_mode = #tpu.pipeline_mode<synchronous>, transform_indices = @transform_1, window_bounds = array<i64: 32, 16>}, {pipeline_mode = #tpu.pipeline_mode<synchronous>, transform_indices = @transform_2, window_bounds = array<i64: 32, 1>}, {pipeline_mode = #tpu.pipeline_mode<synchronous>, transform_indices = @transform_3, window_bounds = array<i64: 32, 32>}, {pipeline_mode = #tpu.pipeline_mode<synchronous>, transform_indices = @transform_4, window_bounds = array<i64: 32, 1>}, {pipeline_mode = #tpu.pipeline_mode<synchronous>, transform_indices = @transform_5, window_bounds = array<i64: 32, 1>}, {transform_indices = @transform_6, window_bounds = array<i64: 1, 1>}, {transform_indices = @transform_7, window_bounds = array<i64: 1, 8>}]} {
    %c0 = arith.constant 0 : index
    %c0_0 = arith.constant 0 : index
    %0 = vector.load %arg1[%c0, %c0_0] : memref<8x16xf32, #tpu.memory_space<vmem>>, vector<8x16xf32>
    %1 = arith.truncf %0 : vector<8x16xf32> to vector<8x16xbf16>
    %c0_1 = arith.constant 0 : index
    %c0_2 = arith.constant 0 : index
    %2 = vector.load %arg2[%c0_1, %c0_2] : memref<32x16xbf16, #tpu.memory_space<vmem>>, vector<32x16xbf16>
    %cst = arith.constant dense<0.000000e+00> : vector<32x8xf32>
    %3 = tpu.matmul %2, %1, %cst {dimension_numbers = #tpu.dot_dimension_numbers<[1], [1], [0], [0], [0, 0, 1, 0], [], []>} : vector<32x16xbf16>, vector<8x16xbf16>, vector<32x8xf32> -> vector<32x8xf32>
    %c0_3 = arith.constant 0 : index
    %c0_4 = arith.constant 0 : index
    %4 = vector.load %arg3[%c0_3, %c0_4] : memref<32x1xf32, #tpu.memory_space<vmem>>, vector<32x1xf32>
    %5 = vector.broadcast %4 : vector<32x1xf32> to vector<32x8xf32>
    %6 = arith.addf %3, %5 : vector<32x8xf32>
    %cst_5 = arith.constant 0.000000e+00 : f32
    %7 = vector.broadcast %cst_5 : f32 to vector<32x8xf32>
    %8 = arith.maximumf %6, %7 : vector<32x8xf32>
    %9 = arith.truncf %8 : vector<32x8xf32> to vector<32x8xbf16>
    %c0_6 = arith.constant 0 : index
    %c0_7 = arith.constant 0 : index
    %10 = vector.load %arg4[%c0_6, %c0_7] : memref<32x32xbf16, #tpu.memory_space<vmem>>, vector<32x32xbf16>
    %cst_8 = arith.constant dense<0.000000e+00> : vector<32x8xf32>
    %11 = tpu.matmul %10, %9, %cst_8 {dimension_numbers = #tpu.dot_dimension_numbers<[1], [0], [0], [1], [0, 0, 1, 1], [], []>} : vector<32x32xbf16>, vector<32x8xbf16>, vector<32x8xf32> -> vector<32x8xf32>
    %c0_9 = arith.constant 0 : index
    %c0_10 = arith.constant 0 : index
    %12 = vector.load %arg5[%c0_9, %c0_10] : memref<32x1xf32, #tpu.memory_space<vmem>>, vector<32x1xf32>
    %13 = vector.broadcast %12 : vector<32x1xf32> to vector<32x8xf32>
    %14 = arith.addf %11, %13 : vector<32x8xf32>
    %cst_11 = arith.constant 0.000000e+00 : f32
    %15 = vector.broadcast %cst_11 : f32 to vector<32x8xf32>
    %16 = arith.maximumf %14, %15 : vector<32x8xf32>
    %c0_12 = arith.constant 0 : index
    %c0_13 = arith.constant 0 : index
    %17 = vector.load %arg6[%c0_12, %c0_13] : memref<32x1xf32, #tpu.memory_space<vmem>>, vector<32x1xf32>
    %18 = vector.broadcast %17 : vector<32x1xf32> to vector<32x8xf32>
    %19 = arith.mulf %18, %16 : vector<32x8xf32>
    %cst_14 = arith.constant dense<0.000000e+00> : vector<8xf32>
    %20 = vector.multi_reduction <add>, %19, %cst_14 [0] : vector<32x8xf32> to vector<8xf32>
    %21 = vector.shape_cast %20 : vector<8xf32> to vector<1x8xf32>
    %c0_15 = arith.constant 0 : index
    %c0_16 = arith.constant 0 : index
    %22 = memref.load %arg7[%c0_15, %c0_16] : memref<1x1xf32, #tpu.memory_space<smem>>
    %23 = vector.broadcast %22 : f32 to vector<1x8xf32>
    %24 = arith.addf %21, %23 : vector<1x8xf32>
    %25 = arith.negf %24 : vector<1x8xf32>
    %26 = math.exp %25 : vector<1x8xf32>
    %cst_17 = arith.constant 1.000000e+00 : f32
    %27 = vector.broadcast %cst_17 : f32 to vector<1x8xf32>
    %28 = arith.addf %27, %26 : vector<1x8xf32>
    %29 = arith.divf %27, %28 : vector<1x8xf32>
    %c0_18 = arith.constant 0 : index
    %c0_19 = arith.constant 0 : index
    %30 = vector.load %arg8[%c0_18, %c0_19] : memref<1x8xf32, #tpu.memory_space<vmem>>, vector<1x8xf32>
    tpu.vector_store %arg8[%c0_18, %c0_19], %29 {strides = array<i32>} : memref<1x8xf32, #tpu.memory_space<vmem>>, vector<1x8xf32>,
    return
  }
  func.func @transform_0(%arg0: i32) -> (i32, i32) {
    %c0_i32 = arith.constant 0 : i32
    %c0_i32_0 = arith.constant 0 : i32
    return %arg0, %c0_i32 : i32, i32
  }
  func.func @transform_1(%arg0: i32) -> (i32, i32) {
    %c0_i32 = arith.constant 0 : i32
    %c0_i32_0 = arith.constant 0 : i32
    %c0_i32_1 = arith.constant 0 : i32
    return %c0_i32, %c0_i32_0 : i32, i32
  }
  func.func @transform_2(%arg0: i32) -> (i32, i32) {
    %c0_i32 = arith.constant 0 : i32
    %c0_i32_0 = arith.constant 0 : i32
    %c0_i32_1 = arith.constant 0 : i32
    return %c0_i32, %c0_i32_0 : i32, i32
  }
  func.func @transform_3(%arg0: i32) -> (i32, i32) {
    %c0_i32 = arith.constant 0 : i32
    %c0_i32_0 = arith.constant 0 : i32
    %c0_i32_1 = arith.constant 0 : i32
    return %c0_i32, %c0_i32_0 : i32, i32
  }
  func.func @transform_4(%arg0: i32) -> (i32, i32) {
    %c0_i32 = arith.constant 0 : i32
    %c0_i32_0 = arith.constant 0 : i32
    %c0_i32_1 = arith.constant 0 : i32
    return %c0_i32, %c0_i32_0 : i32, i32
  }
  func.func @transform_5(%arg0: i32) -> (i32, i32) {
    %c0_i32 = arith.constant 0 : i32
    %c0_i32_0 = arith.constant 0 : i32
    %c0_i32_1 = arith.constant 0 : i32
    return %c0_i32, %c0_i32_0 : i32, i32
  }
  func.func @transform_6(%arg0: i32) -> (i32, i32) {
    %c0_i32 = arith.constant 0 : i32
    %c0_i32_0 = arith.constant 0 : i32
    %c0_i32_1 = arith.constant 0 : i32
    return %c0_i32, %c0_i32_0 : i32, i32
  }
  func.func @transform_7(%arg0: i32) -> (i32, i32) {
    %c0_i32 = arith.constant 0 : i32
    %c0_i32_0 = arith.constant 0 : i32
    return %c0_i32, %arg0 : i32, i32
  }
}

module attributes {stable_mosaic.version = 11 : i64} {
  func.func @_mlp_kernel(%arg0: i32, %arg1: memref<8x16xf32, #tpu.memory_space<vmem>>, %arg2: memref<32x16xbf16, #tpu.memory_space<vmem>>, %arg3: memref<32x1xf32, #tpu.memory_space<vmem>>, %arg4: memref<32x32xbf16, #tpu.memory_space<vmem>>, %arg5: memref<32x1xf32, #tpu.memory_space<vmem>>, %arg6: memref<32x1xf32, #tpu.memory_space<vmem>>, %arg7: memref<1x1xf32, #tpu.memory_space<smem>>, %arg8: memref<1x8xf32, #tpu.memory_space<vmem>>) attributes {dimension_semantics = [#tpu.dimension_semantics<parallel>], iteration_bounds = array<i64: 1>, scalar_prefetch = 0 : i64, scratch_operands = 0 : i64, tpu.core_type = #tpu.core_type<tc>, window_params = [{transform_indices = @transform_0, window_bounds = array<i64: 8, 16>}, {pipeline_mode = #tpu.pipeline_mode<synchronous>, transform_indices = @transform_1, window_bounds = array<i64: 32, 16>}, {pipeline_mode = #tpu.pipeline_mode<synchronous>, transform_indices = @transform_2, window_bounds = array<i64: 32, 1>}, {pipeline_mode = #tpu.pipeline_mode<synchronous>, transform_indices = @transform_3, window_bounds = array<i64: 32, 32>}, {pipeline_mode = #tpu.pipeline_mode<synchronous>, transform_indices = @transform_4, window_bounds = array<i64: 32, 1>}, {pipeline_mode = #tpu.pipeline_mode<synchronous>, transform_indices = @transform_5, window_bounds = array<i64: 32, 1>}, {transform_indices = @transform_6, window_bounds = array<i64: 1, 1>}, {transform_indices = @transform_7, window_bounds = array<i64: 1, 8>}]} {
    %c0 = arith.constant 0 : index
    %c0_0 = arith.constant 0 : index
    %0 = vector.load %arg1[%c0, %c0_0] : memref<8x16xf32, #tpu.memory_space<vmem>>, vector<8x16xf32>
    %1 = arith.truncf %0 : vector<8x16xf32> to vector<8x16xbf16>
    %c0_1 = arith.constant 0 : index
    %c0_2 = arith.constant 0 : index
    %2 = vector.load %arg2[%c0_1, %c0_2] : memref<32x16xbf16, #tpu.memory_space<vmem>>, vector<32x16xbf16>
    %cst = arith.constant dense<0.000000e+00> : vector<32x8xf32>
    %3 = tpu.matmul %2, %1, %cst {dimension_numbers = #tpu.dot_dimension_numbers<[1], [1], [0], [0], [0, 0, 1, 0], [], []>} : vector<32x16xbf16>, vector<8x16xbf16>, vector<32x8xf32> -> vector<32x8xf32>
    %c0_3 = arith.constant 0 : index
    %c0_4 = arith.constant 0 : index
    %4 = vector.load %arg3[%c0_3, %c0_4] : memref<32x1xf32, #tpu.memory_space<vmem>>, vector<32x1xf32>
    %5 = vector.broadcast %4 : vector<32x1xf32> to vector<32x8xf32>
    %6 = arith.addf %3, %5 : vector<32x8xf32>
    %cst_5 = arith.constant 0.000000e+00 : f32
    %7 = vector.broadcast %cst_5 : f32 to vector<32x8xf32>
    %8 = arith.maximumf %6, %7 : vector<32x8xf32>
    %9 = arith.truncf %8 : vector<32x8xf32> to vector<32x8xbf16>
    %c0_6 = arith.constant 0 : index
    %c0_7 = arith.constant 0 : index
    %10 = vector.load %arg4[%c0_6, %c0_7] : memref<32x32xbf16, #tpu.memory_space<vmem>>, vector<32x32xbf16>
    %cst_8 = arith.constant dense<0.000000e+00> : vector<32x8xf32>
    %11 = tpu.matmul %10, %9, %cst_8 {dimension_numbers = #tpu.dot_dimension_numbers<[1], [0], [0], [1], [0, 0, 1, 1], [], []>} : vector<32x32xbf16>, vector<32x8xbf16>, vector<32x8xf32> -> vector<32x8xf32>
    %c0_9 = arith.constant 0 : index
    %c0_10 = arith.constant 0 : index
    %12 = vector.load %arg5[%c0_9, %c0_10] : memref<32x1xf32, #tpu.memory_space<vmem>>, vector<32x1xf32>
    %13 = vector.broadcast %12 : vector<32x1xf32> to vector<32x8xf32>
    %14 = arith.addf %11, %13 : vector<32x8xf32>
    %cst_11 = arith.constant 0.000000e+00 : f32
    %15 = vector.broadcast %cst_11 : f32 to vector<32x8xf32>
    %16 = arith.maximumf %14, %15 : vector<32x8xf32>
    %c0_12 = arith.constant 0 : index
    %c0_13 = arith.constant 0 : index
    %17 = vector.load %arg6[%c0_12, %c0_13] : memref<32x1xf32, #tpu.memory_space<vmem>>, vector<32x1xf32>
    %18 = vector.broadcast %17 : vector<32x1xf32> to vector<32x8xf32>
    %19 = arith.mulf %18, %16 : vector<32x8xf32>
    %cst_14 = arith.constant dense<0.000000e+00> : vector<8xf32>
    %20 = vector.multi_reduction <add>, %19, %cst_14 [0] : vector<32x8xf32> to vector<8xf32>
    %21 = vector.shape_cast %20 : vector<8xf32> to vector<1x8xf32>
    %c0_15 = arith.constant 0 : index
    %c0_16 = arith.constant 0 : index
    %22 = memref.load %arg7[%c0_15, %c0_16] : memref<1x1xf32, #tpu.memory_space<smem>>
    %23 = vector.broadcast %22 : f32 to vector<1x8xf32>
    %24 = arith.addf %21, %23 : vector<1x8xf32>
    %25 = arith.negf %24 : vector<1x8xf32>
    %26 = math.exp %25 : vector<1x8xf32>
    %cst_17 = arith.constant 1.000000e+00 : f32
    %27 = vector.broadcast %cst_17 : f32 to vector<1x8xf32>
    %28 = arith.addf %27, %26 : vector<1x8xf32>
    %29 = arith.divf %27, %28 : vector<1x8xf32>
    %c0_18 = arith.constant 0 : index
    %c0_19 = arith.constant 0 : index
    %30 = vector.load %arg8[%c0_18, %c0_19] : memref<1x8xf32, #tpu.memory_space<vmem>>, vector<1x8xf32>
    tpu.vector_store %arg8[%c0_18, %c0_19], %29 {strides = array<i32>} : memref<1x8xf32, #tpu.memory_space<vmem>>, vector<1x8xf32>,
    return
  }
  func.func @transform_0(%arg0: i32) -> (i32, i32) {
    %c0_i32 = arith.constant 0 : i32
    %c0_i32_0 = arith.constant 0 : i32
    return %arg0, %c0_i32 : i32, i32
  }
  func.func @transform_1(%arg0: i32) -> (i32, i32) {
    %c0_i32 = arith.constant 0 : i32
    %c0_i32_0 = arith.constant 0 : i32
    %c0_i32_1 = arith.constant 0 : i32
    return %c0_i32, %c0_i32_0 : i32, i32
  }
  func.func @transform_2(%arg0: i32) -> (i32, i32) {
    %c0_i32 = arith.constant 0 : i32
    %c0_i32_0 = arith.constant 0 : i32
    %c0_i32_1 = arith.constant 0 : i32
    return %c0_i32, %c0_i32_0 : i32, i32
  }
  func.func @transform_3(%arg0: i32) -> (i32, i32) {
    %c0_i32 = arith.constant 0 : i32
    %c0_i32_0 = arith.constant 0 : i32
    %c0_i32_1 = arith.constant 0 : i32
    return %c0_i32, %c0_i32_0 : i32, i32
  }
  func.func @transform_4(%arg0: i32) -> (i32, i32) {
    %c0_i32 = arith.constant 0 : i32
    %c0_i32_0 = arith.constant 0 : i32
    %c0_i32_1 = arith.constant 0 : i32
    return %c0_i32, %c0_i32_0 : i32, i32
  }
  func.func @transform_5(%arg0: i32) -> (i32, i32) {
    %c0_i32 = arith.constant 0 : i32
    %c0_i32_0 = arith.constant 0 : i32
    %c0_i32_1 = arith.constant 0 : i32
    return %c0_i32, %c0_i32_0 : i32, i32
  }
  func.func @transform_6(%arg0: i32) -> (i32, i32) {
    %c0_i32 = arith.constant 0 : i32
    %c0_i32_0 = arith.constant 0 : i32
    %c0_i32_1 = arith.constant 0 : i32
    return %c0_i32, %c0_i32_0 : i32, i32
  }
  func.func @transform_7(%arg0: i32) -> (i32, i32) {
    %c0_i32 = arith.constant 0 : i32
    %c0_i32_0 = arith.constant 0 : i32
    return %c0_i32, %arg0 : i32, i32
  }
}

</mosaic_0001>

<llo_original>
// kernel: tpu_custom_call.1
$region0: #{tpu_custom_call.1}
  #allocation0 [shape = 'u32[]', space=smem, size = 0x4, offset = 0x4, fixed_abs, tag = 'smem constant byte address 0x4 - core index']
  #allocation1 [shape = 'u32[144,128]{1,0:T(1,128)}', space=vmem, size = 0x12000, scoped, tag = 'internal scratch']
  #allocation2 [shape = 'f32[1,1]{1,0:T(1,128)S(6)}', space=smem, size = 0x200, scoped, tag = 'scoped memory for tpu_custom_call.1']
  %s0 = inlined_call_operand.vmem [shape: f32[8,16], index: 0, kind: input, shape index: {}]
  %s1 = inlined_call_operand.vmem [shape: bf16[32,16], index: 1, kind: input, shape index: {}]
  %s2 = inlined_call_operand.vmem [shape: f32[32,1], index: 2, kind: input, shape index: {}]
  %s3 = inlined_call_operand.vmem [shape: bf16[32,32], index: 3, kind: input, shape index: {}]
  %s4 = inlined_call_operand.vmem [shape: f32[32,1], index: 4, kind: input, shape index: {}]
  %s5 = inlined_call_operand.vmem [shape: f32[32,1], index: 5, kind: input, shape index: {}]
  %s6 = inlined_call_operand.<no memory space> [shape: f32[1,1], index: 6, kind: input, shape index: {}]
  %s7 = inlined_call_operand.hbm [shape: f32[1,8], index: 7, kind: output, shape index: {}]
  %s8 = sld [smem:[#allocation0]]
  $region38: #{tpu_custom_call.1} parent=0
    _
  %s10 = ssub.s32 1, %s8
  %s11 = scalar_select 0, %s10, %s8
  %12 = sst [smem:[#allocation2]] %s6
  $region1: #{tpu_custom_call.1} parent=0
    #allocation3 [shape = 'u8[512]{0}', space=vmem, size = 0x400, scoped, tag = 'output window, operand 0, single buffered']
    #allocation4 [shape = 's32[1]{0}', space=sflag, size = 0x4, scoped, tag = 'scoped memory for tpu_custom_call.1']
    %13 = vsyncpa [#allocation4], 0
    // Predicated region
    $region2: #{tpu_custom_call.1} parent=1 // pred_check
      _
    $region3: #{tpu_custom_call.1} parent=1 // pred_check_branch
      %15 = sbr.rel (0) target = $region5
    $region4: #{tpu_custom_call.1} parent=1 // pred_region
      _
    $region5: #{tpu_custom_call.1} parent=1 // pred_fallthru
      _
    // Predicated region
    $region6: #{tpu_custom_call.1} parent=1 // pred_check
      _
    $region7: #{tpu_custom_call.1} parent=1 // pred_check_branch
      %17 = sbr.rel (0) target = $region9
    $region8: #{tpu_custom_call.1} parent=1 // pred_region
      _
    $region9: #{tpu_custom_call.1} parent=1 // pred_fallthru
      _
    // Predicated region
    $region10: #{tpu_custom_call.1} parent=1 // pred_check
      _
    $region11: #{tpu_custom_call.1} parent=1 // pred_check_branch
      %19 = sbr.rel (0) target = $region13
    $region12: #{tpu_custom_call.1} parent=1 // pred_region
      _
    $region13: #{tpu_custom_call.1} parent=1 // pred_fallthru
      _
    // Predicated region
    $region14: #{tpu_custom_call.1} parent=1 // pred_check
      _
    $region15: #{tpu_custom_call.1} parent=1 // pred_check_branch
      %21 = sbr.rel (0) target = $region17
    $region16: #{tpu_custom_call.1} parent=1 // pred_region
      _
    $region17: #{tpu_custom_call.1} parent=1 // pred_fallthru
      _
    // Predicated region
    $region18: #{tpu_custom_call.1} parent=1 // pred_check
      _
    $region19: #{tpu_custom_call.1} parent=1 // pred_check_branch
      %23 = sbr.rel (0) target = $region21
    $region20: #{tpu_custom_call.1} parent=1 // pred_region
      _
    $region21: #{tpu_custom_call.1} parent=1 // pred_fallthru
      _
    // Predicated region
    $region22: #{tpu_custom_call.1} parent=1 // pred_check
      _
    $region23: #{tpu_custom_call.1} parent=1 // pred_check_branch
      %25 = sbr.rel (0) target = $region25
    $region24: #{tpu_custom_call.1} parent=1 // pred_region
      _
    $region25: #{tpu_custom_call.1} parent=1 // pred_fallthru
      _
    // Predicated region
    $region26: #{tpu_custom_call.1} parent=1 // pred_check
      _
    $region27: #{tpu_custom_call.1} parent=1 // pred_check_branch
      %27 = sbr.rel (0) target = $region29
    $region28: #{tpu_custom_call.1} parent=1 // pred_region
      _
    $region29: #{tpu_custom_call.1} parent=1 // pred_fallthru
      _
    %v29 = vld [vmem:[%s0] sm:$0xff]
    %v30 = vpack.c.bf16 %v29, %v29
    %v31 = vld [vmem:[%s1] sm:$0xf]
    %v32 = vld [vmem:[%s1 + $0x4] sm:$0xf]
    %v33 = vld [vmem:[%s1 + $0x8] sm:$0xf]
    %v34 = vld [vmem:[%s1 + $0xc] sm:$0xf]
    %v35 = vld [vmem:[%s2] sm:$0xff]
    %v36 = vld [vmem:[%s2 + $0x8] sm:$0xff]
    %v37 = vld [vmem:[%s2 + $0x10] sm:$0xff]
    %v38 = vld [vmem:[%s2 + $0x18] sm:$0xff]
    %40 = vset.pattern.permute.xlu0 0
    %41 = vperm.xlu0 %40, %v35
    %v42 = vpop.permute.xlu0 %41
    %45 = vset.pattern.permute.xlu0 0
    %46 = vperm.xlu0 %45, %v36
    %v47 = vpop.permute.xlu0 %46
    %50 = vset.pattern.permute.xlu0 0
    %51 = vperm.xlu0 %50, %v37
    %v52 = vpop.permute.xlu0 %51
    %55 = vset.pattern.permute.xlu0 0
    %56 = vperm.xlu0 %55, %v38
    %v57 = vpop.permute.xlu0 %56
    %v63 = vunpack.c.l.b16 %v31
    %v64 = vunpack.c.l.b16 %v32
    %v65 = vunpack.c.l.b16 %v33
    %v66 = vunpack.c.l.b16 %v34
    %v67 = vpack.c.b16 %v64, %v63
    %v68 = vpack.c.b16 %v66, %v65
    %vm69 = vcmask 130048
    %v71 = vsel %vm69, %v67, 0
    %v74 = vsel %vm69, %v68, 0
    %v77 = vsel %vm69, %v30, 0
    %79 = vmatprep.subr.bf16.mxu0 0
    %80 = vmatpush1.bf16.xpose.msra.mxu0 0
    %81 = vmatprep.subr.bf16.mxu0 0
    %82 = vmatpush1.bf16.xpose.msra.mxu0 0
    %83 = vmatprep.subr.bf16.mxu0 0
    %84 = vmatpush1.bf16.xpose.msra.mxu0 0
    %85 = vmatprep.subr.bf16.mxu0 0
    %86 = vmatpush1.bf16.xpose.msra.mxu0 0
    %87 = vmatprep.subr.bf16.mxu0 0
    %88 = vmatpush1.bf16.xpose.msra.mxu0 0
    %89 = vmatprep.subr.bf16.mxu0 0
    %90 = vmatpush1.bf16.xpose.msra.mxu0 0
    %91 = vmatprep.subr.bf16.mxu0 0
    %92 = vmatpush1.bf16.xpose.msra.mxu0 0
    %93 = vmatprep.subr.bf16.mxu0 0
    %94 = vmatpush1.bf16.xpose.msra.mxu0 %v77
    %95 = vmatprep.subr.bf16.mxu0 0
    %96 = vmatpush2.bf16.xpose.msra.mxu0 0
    %97 = vmatprep.subr.bf16.mxu0 0
    %98 = vmatpush2.bf16.xpose.msra.mxu0 0
    %99 = vmatprep.subr.bf16.mxu0 0
    %100 = vmatpush2.bf16.xpose.msra.mxu0 0
    %101 = vmatprep.subr.bf16.mxu0 0
    %102 = vmatpush2.bf16.xpose.msra.mxu0 0
    %103 = vmatprep.subr.bf16.mxu0 0
    %104 = vmatpush2.bf16.xpose.msra.mxu0 0
    %105 = vmatprep.subr.bf16.mxu0 0
    %106 = vmatpush2.bf16.xpose.msra.mxu0 0
    %107 = vmatprep.subr.bf16.mxu0 0
    %108 = vmatpush2.bf16.xpose.msra.mxu0 0
    %109 = vmatprep.subr.bf16.mxu0 0
    %110 = vmatpush2.bf16.xpose.msra.mxu0 0
    %111 = vmatprep.mubr.bf16.mxu0 0
    %112 = vmatmul.mubr.bf16.gmra.mxu0 %v71
    %v113 = vpop.f32.mrf.mxu0
    %v114 = vadd.f32 %v42, %v113
    %v115 = vpop.f32.mrf.mxu0
    %v116 = vpop.f32.mrf.mxu0
    %v117 = vadd.f32 %v47, %v116
    %v118 = vpop.f32.mrf.mxu0
    %119 = vmatprep.mubr.bf16.mxu0 0
    %120 = vmatmul.mubr.bf16.gmra.mxu0 %v74
    %v121 = vpop.f32.mrf.mxu0
    %v122 = vadd.f32 %v52, %v121
    %v123 = vpop.f32.mrf.mxu0
    %v124 = vpop.f32.mrf.mxu0
    %v125 = vadd.f32 %v57, %v124
    %v126 = vpop.f32.mrf.mxu0
    %127 = vdwg.mxu0
    %v128 = vmax.f32 %v114, 0.0
    %v129 = vmax.f32 %v117, 0.0
    %v130 = vmax.f32 %v122, 0.0
    %v131 = vmax.f32 %v125, 0.0
    %v132 = vpack.c.bf16 %v129, %v128
    %v133 = vpack.c.bf16 %v131, %v130
    %v134 = vld [vmem:[%s3] sm:$0xf]
    %v135 = vld [vmem:[%s3 + $0x4] sm:$0xf]
    %v136 = vld [vmem:[%s3 + $0x8] sm:$0xf]
    %v137 = vld [vmem:[%s3 + $0xc] sm:$0xf]
    %v138 = vld [vmem:[%s4] sm:$0xff]
    %v139 = vld [vmem:[%s4 + $0x8] sm:$0xff]
    %v140 = vld [vmem:[%s4 + $0x10] sm:$0xff]
    %v141 = vld [vmem:[%s4 + $0x18] sm:$0xff]
    %143 = vset.pattern.permute.xlu0 0
    %144 = vperm.xlu0 %143, %v138
    %v145 = vpop.permute.xlu0 %144
    %148 = vset.pattern.permute.xlu0 0
    %149 = vperm.xlu0 %148, %v139
    %v150 = vpop.permute.xlu0 %149
    %153 = vset.pattern.permute.xlu0 0
    %154 = vperm.xlu0 %153, %v140
    %v155 = vpop.permute.xlu0 %154
    %158 = vset.pattern.permute.xlu0 0
    %159 = vperm.xlu0 %158, %v141
    %v160 = vpop.permute.xlu0 %159
    %v166 = vunpack.c.l.b16 %v134
    %v167 = vunpack.c.l.b16 %v135
    %v168 = vunpack.c.l.b16 %v136
    %v169 = vunpack.c.l.b16 %v137
    %v170 = vpack.c.b16 %v167, %v166
    %v171 = vpack.c.b16 %v169, %v168
    %vm172 = vcmask 261120
    %v174 = vsel %vm172, %v170, 0
    %v177 = vsel %vm172, %v171, 0
    %179 = vmatprep.subr.bf16.mxu0 0
    %180 = vmatpush1.bf16.msra.mxu0 0
    %181 = vmatprep.subr.bf16.mxu0 0
    %182 = vmatpush1.bf16.msra.mxu0 0
    %183 = vmatprep.subr.bf16.mxu0 0
    %184 = vmatpush1.bf16.msra.mxu0 0
    %185 = vmatprep.subr.bf16.mxu0 0
    %186 = vmatpush1.bf16.msra.mxu0 0
    %187 = vmatprep.subr.bf16.mxu0 0
    %188 = vmatpush1.bf16.msra.mxu0 0
    %189 = vmatprep.subr.bf16.mxu0 0
    %190 = vmatpush1.bf16.msra.mxu0 0
    %191 = vmatprep.subr.bf16.mxu0 0
    %192 = vmatpush1.bf16.msra.mxu0 %v133
    %193 = vmatprep.subr.bf16.mxu0 0
    %194 = vmatpush1.bf16.msra.mxu0 %v132
    %195 = vmatprep.subr.bf16.mxu0 0
    %196 = vmatpush2.bf16.msra.mxu0 0
    %197 = vmatprep.subr.bf16.mxu0 0
    %198 = vmatpush2.bf16.msra.mxu0 0
    %199 = vmatprep.subr.bf16.mxu0 0
    %200 = vmatpush2.bf16.msra.mxu0 0
    %201 = vmatprep.subr.bf16.mxu0 0
    %202 = vmatpush2.bf16.msra.mxu0 0
    %203 = vmatprep.subr.bf16.mxu0 0
    %204 = vmatpush2.bf16.msra.mxu0 0
    %205 = vmatprep.subr.bf16.mxu0 0
    %206 = vmatpush2.bf16.msra.mxu0 0
    %207 = vmatprep.subr.bf16.mxu0 0
    %208 = vmatpush2.bf16.msra.mxu0 0
    %209 = vmatprep.subr.bf16.mxu0 0
    %210 = vmatpush2.bf16.msra.mxu0 0
    %211 = vmatprep.mubr.bf16.mxu0 0
    %212 = vmatmul.mubr.bf16.gmra.mxu0 %v174
    %v213 = vpop.f32.mrf.mxu0
    %v214 = vadd.f32 %v145, %v213
    %v215 = vpop.f32.mrf.mxu0
    %v216 = vpop.f32.mrf.mxu0
    %v217 = vadd.f32 %v150, %v216
    %v218 = vpop.f32.mrf.mxu0
    %219 = vmatprep.mubr.bf16.mxu0 0
    %220 = vmatmul.mubr.bf16.gmra.mxu0 %v177
    %v221 = vpop.f32.mrf.mxu0
    %v222 = vadd.f32 %v155, %v221
    %v223 = vpop.f32.mrf.mxu0
    %v224 = vpop.f32.mrf.mxu0
    %v225 = vadd.f32 %v160, %v224
    %v226 = vpop.f32.mrf.mxu0
    %227 = vdwg.mxu0
    %v228 = vmax.f32 %v214, 0.0
    %v229 = vmax.f32 %v217, 0.0
    %v230 = vmax.f32 %v222, 0.0
    %v231 = vmax.f32 %v225, 0.0
    %v232 = vld [vmem:[%s5] sm:$0xff]
    %v233 = vld [vmem:[%s5 + $0x8] sm:$0xff]
    %v234 = vld [vmem:[%s5 + $0x10] sm:$0xff]
    %v235 = vld [vmem:[%s5 + $0x18] sm:$0xff]
    %237 = vset.pattern.permute.xlu0 0
    %238 = vperm.xlu0 %237, %v232
    %v239 = vpop.permute.xlu0 %238
    %242 = vset.pattern.permute.xlu0 0
    %243 = vperm.xlu0 %242, %v233
    %v244 = vpop.permute.xlu0 %243
    %247 = vset.pattern.permute.xlu0 0
    %248 = vperm.xlu0 %247, %v234
    %v249 = vpop.permute.xlu0 %248
    %252 = vset.pattern.permute.xlu0 0
    %253 = vperm.xlu0 %252, %v235
    %v254 = vpop.permute.xlu0 %253
    %v256 = vmul.f32 %v239, %v228
    %v257 = vmul.f32 %v244, %v229
    %v258 = vmul.f32 %v249, %v230
    %v259 = vmul.f32 %v254, %v231
    %vm260 = vcmask 64512
    %v261 = vsel %vm260, %v256, 0.0
    %v262 = vsel %vm260, %v257, 0.0
    %v263 = vadd.f32 %v261, %v262
    %v264 = vsel %vm260, %v258, 0.0
    %v265 = vadd.f32 %v263, %v264
    %v266 = vsel %vm260, %v259, 0.0
    %v267 = vadd.f32 %v265, %v266
    %v268 = vrot.slane %v267, 4
    %v269 = vadd.f32 %v267, %v268
    %v270 = vrot.slane %v269, 2
    %v271 = vadd.f32 %v269, %v270
    %v272 = vrot.slane %v271, 1
    %v273 = vadd.f32 %v271, %v272
    %s274 = sld [smem:[#allocation2]]
    %v275 = vstv %s274
    %v276 = vadd.f32 %v273, %v275
    %v277 = vxor.u32 %v276, 2147483648
    %v278 = vmul.f32 %v277, 1.442695
    %v279 = vpow.pop %v278
    %v280 = vadd.f32 %v279, 1.0
    %v281 = vrcp.pop %v280
    %v282 = vmul.f32 1.0, %v281
    %vm283 = vcmask 57344
    %284 = vst.msk [vmem:[#allocation3] sm:$0x1] %vm283, %v282
    // Predicated region
    $region30: #{tpu_custom_call.1} parent=1 // pred_check
      _
    $region31: #{tpu_custom_call.1} parent=1 // pred_check_branch
      %286 = sbr.rel (0) target = $region33
    $region32: #{tpu_custom_call.1} parent=1 // pred_region
      %s288 = ssub.s32 16, 16
      %289 = vsyncadd [#allocation4], %s288
      %s291 = sshll.u32 [#allocation3], 4
      %s292 = int_to_ptr.vmem [resolvable:$true] %s291
      %294 = dma.vmem_to_hbm [thread:$0]  %s292, 16, %s7, [#allocation4]
    $region33: #{tpu_custom_call.1} parent=1 // pred_fallthru
      _
    // Predicated region
    $region34: #{tpu_custom_call.1} parent=1 // pred_check
      _
    $region35: #{tpu_custom_call.1} parent=1 // pred_check_branch
      %296 = sbr.rel (0) target = $region37
    $region36: #{tpu_custom_call.1} parent=1 // pred_region
      %297 = dma.done [#allocation4], 16
    $region37: #{tpu_custom_call.1} parent=1 // pred_fallthru
      _
    %298 = vsyncpa [#allocation4], 1

// kernel: tpu_custom_call.1
$region0: #{tpu_custom_call.1}
  #allocation0 [shape = 'u32[]', space=smem, size = 0x4, offset = 0x4, fixed_abs, tag = 'smem constant byte address 0x4 - core index']
  #allocation1 [shape = 'u32[144,128]{1,0:T(1,128)}', space=vmem, size = 0x12000, scoped, tag = 'internal scratch']
  #allocation2 [shape = 'f32[1,1]{1,0:T(1,128)S(6)}', space=smem, size = 0x200, scoped, tag = 'scoped memory for tpu_custom_call.1']
  %s0 = inlined_call_operand.vmem [shape: f32[8,16], index: 0, kind: input, shape index: {}]
  %s1 = inlined_call_operand.vmem [shape: bf16[32,16], index: 1, kind: input, shape index: {}]
  %s2 = inlined_call_operand.vmem [shape: f32[32,1], index: 2, kind: input, shape index: {}]
  %s3 = inlined_call_operand.vmem [shape: bf16[32,32], index: 3, kind: input, shape index: {}]
  %s4 = inlined_call_operand.vmem [shape: f32[32,1], index: 4, kind: input, shape index: {}]
  %s5 = inlined_call_operand.vmem [shape: f32[32,1], index: 5, kind: input, shape index: {}]
  %s6 = inlined_call_operand.<no memory space> [shape: f32[1,1], index: 6, kind: input, shape index: {}]
  %s7 = inlined_call_operand.hbm [shape: f32[1,8], index: 7, kind: output, shape index: {}]
  %s8 = sld [smem:[#allocation0]]
  $region38: #{tpu_custom_call.1} parent=0
    _
  %s10 = ssub.s32 1, %s8
  %s11 = scalar_select 0, %s10, %s8
  %12 = sst [smem:[#allocation2]] %s6
  $region1: #{tpu_custom_call.1} parent=0
    #allocation3 [shape = 'u8[512]{0}', space=vmem, size = 0x400, scoped, tag = 'output window, operand 0, single buffered']
    #allocation4 [shape = 's32[1]{0}', space=sflag, size = 0x4, scoped, tag = 'scoped memory for tpu_custom_call.1']
    %13 = vsyncpa [#allocation4], 0
    // Predicated region
    $region2: #{tpu_custom_call.1} parent=1 // pred_check
      _
    $region3: #{tpu_custom_call.1} parent=1 // pred_check_branch
      %15 = sbr.rel (0) target = $region5
    $region4: #{tpu_custom_call.1} parent=1 // pred_region
      _
    $region5: #{tpu_custom_call.1} parent=1 // pred_fallthru
      _
    // Predicated region
    $region6: #{tpu_custom_call.1} parent=1 // pred_check
      _
    $region7: #{tpu_custom_call.1} parent=1 // pred_check_branch
      %17 = sbr.rel (0) target = $region9
    $region8: #{tpu_custom_call.1} parent=1 // pred_region
      _
    $region9: #{tpu_custom_call.1} parent=1 // pred_fallthru
      _
    // Predicated region
    $region10: #{tpu_custom_call.1} parent=1 // pred_check
      _
    $region11: #{tpu_custom_call.1} parent=1 // pred_check_branch
      %19 = sbr.rel (0) target = $region13
    $region12: #{tpu_custom_call.1} parent=1 // pred_region
      _
    $region13: #{tpu_custom_call.1} parent=1 // pred_fallthru
      _
    // Predicated region
    $region14: #{tpu_custom_call.1} parent=1 // pred_check
      _
    $region15: #{tpu_custom_call.1} parent=1 // pred_check_branch
      %21 = sbr.rel (0) target = $region17
    $region16: #{tpu_custom_call.1} parent=1 // pred_region
      _
    $region17: #{tpu_custom_call.1} parent=1 // pred_fallthru
      _
    // Predicated region
    $region18: #{tpu_custom_call.1} parent=1 // pred_check
      _
    $region19: #{tpu_custom_call.1} parent=1 // pred_check_branch
      %23 = sbr.rel (0) target = $region21
    $region20: #{tpu_custom_call.1} parent=1 // pred_region
      _
    $region21: #{tpu_custom_call.1} parent=1 // pred_fallthru
      _
    // Predicated region
    $region22: #{tpu_custom_call.1} parent=1 // pred_check
      _
    $region23: #{tpu_custom_call.1} parent=1 // pred_check_branch
      %25 = sbr.rel (0) target = $region25
    $region24: #{tpu_custom_call.1} parent=1 // pred_region
      _
    $region25: #{tpu_custom_call.1} parent=1 // pred_fallthru
      _
    // Predicated region
    $region26: #{tpu_custom_call.1} parent=1 // pred_check
      _
    $region27: #{tpu_custom_call.1} parent=1 // pred_check_branch
      %27 = sbr.rel (0) target = $region29
    $region28: #{tpu_custom_call.1} parent=1 // pred_region
      _
    $region29: #{tpu_custom_call.1} parent=1 // pred_fallthru
      _
    %v29 = vld [vmem:[%s0] sm:$0xff]
    %v30 = vpack.c.bf16 %v29, %v29
    %v31 = vld [vmem:[%s1] sm:$0xf]
    %v32 = vld [vmem:[%s1 + $0x4] sm:$0xf]
    %v33 = vld [vmem:[%s1 + $0x8] sm:$0xf]
    %v34 = vld [vmem:[%s1 + $0xc] sm:$0xf]
    %v35 = vld [vmem:[%s2] sm:$0xff]
    %v36 = vld [vmem:[%s2 + $0x8] sm:$0xff]
    %v37 = vld [vmem:[%s2 + $0x10] sm:$0xff]
    %v38 = vld [vmem:[%s2 + $0x18] sm:$0xff]
    %40 = vset.pattern.permute.xlu0 0
    %41 = vperm.xlu0 %40, %v35
    %v42 = vpop.permute.xlu0 %41
    %45 = vset.pattern.permute.xlu0 0
    %46 = vperm.xlu0 %45, %v36
    %v47 = vpop.permute.xlu0 %46
    %50 = vset.pattern.permute.xlu0 0
    %51 = vperm.xlu0 %50, %v37
    %v52 = vpop.permute.xlu0 %51
    %55 = vset.pattern.permute.xlu0 0
    %56 = vperm.xlu0 %55, %v38
    %v57 = vpop.permute.xlu0 %56
    %v63 = vunpack.c.l.b16 %v31
    %v64 = vunpack.c.l.b16 %v32
    %v65 = vunpack.c.l.b16 %v33
    %v66 = vunpack.c.l.b16 %v34
    %v67 = vpack.c.b16 %v64, %v63
    %v68 = vpack.c.b16 %v66, %v65
    %vm69 = vcmask 130048
    %v71 = vsel %vm69, %v67, 0
    %v74 = vsel %vm69, %v68, 0
    %v77 = vsel %vm69, %v30, 0
    %79 = vmatprep.subr.bf16.mxu0 0
    %80 = vmatpush1.bf16.xpose.msra.mxu0 0
    %81 = vmatprep.subr.bf16.mxu0 0
    %82 = vmatpush1.bf16.xpose.msra.mxu0 0
    %83 = vmatprep.subr.bf16.mxu0 0
    %84 = vmatpush1.bf16.xpose.msra.mxu0 0
    %85 = vmatprep.subr.bf16.mxu0 0
    %86 = vmatpush1.bf16.xpose.msra.mxu0 0
    %87 = vmatprep.subr.bf16.mxu0 0
    %88 = vmatpush1.bf16.xpose.msra.mxu0 0
    %89 = vmatprep.subr.bf16.mxu0 0
    %90 = vmatpush1.bf16.xpose.msra.mxu0 0
    %91 = vmatprep.subr.bf16.mxu0 0
    %92 = vmatpush1.bf16.xpose.msra.mxu0 0
    %93 = vmatprep.subr.bf16.mxu0 0
    %94 = vmatpush1.bf16.xpose.msra.mxu0 %v77
    %95 = vmatprep.subr.bf16.mxu0 0
    %96 = vmatpush2.bf16.xpose.msra.mxu0 0
    %97 = vmatprep.subr.bf16.mxu0 0
    %98 = vmatpush2.bf16.xpose.msra.mxu0 0
    %99 = vmatprep.subr.bf16.mxu0 0
    %100 = vmatpush2.bf16.xpose.msra.mxu0 0
    %101 = vmatprep.subr.bf16.mxu0 0
    %102 = vmatpush2.bf16.xpose.msra.mxu0 0
    %103 = vmatprep.subr.bf16.mxu0 0
    %104 = vmatpush2.bf16.xpose.msra.mxu0 0
    %105 = vmatprep.subr.bf16.mxu0 0
    %106 = vmatpush2.bf16.xpose.msra.mxu0 0
    %107 = vmatprep.subr.bf16.mxu0 0
    %108 = vmatpush2.bf16.xpose.msra.mxu0 0
    %109 = vmatprep.subr.bf16.mxu0 0
    %110 = vmatpush2.bf16.xpose.msra.mxu0 0
    %111 = vmatprep.mubr.bf16.mxu0 0
    %112 = vmatmul.mubr.bf16.gmra.mxu0 %v71
    %v113 = vpop.f32.mrf.mxu0
    %v114 = vadd.f32 %v42, %v113
    %v115 = vpop.f32.mrf.mxu0
    %v116 = vpop.f32.mrf.mxu0
    %v117 = vadd.f32 %v47, %v116
    %v118 = vpop.f32.mrf.mxu0
    %119 = vmatprep.mubr.bf16.mxu0 0
    %120 = vmatmul.mubr.bf16.gmra.mxu0 %v74
    %v121 = vpop.f32.mrf.mxu0
    %v122 = vadd.f32 %v52, %v121
    %v123 = vpop.f32.mrf.mxu0
    %v124 = vpop.f32.mrf.mxu0
    %v125 = vadd.f32 %v57, %v124
    %v126 = vpop.f32.mrf.mxu0
    %127 = vdwg.mxu0
    %v128 = vmax.f32 %v114, 0.0
    %v129 = vmax.f32 %v117, 0.0
    %v130 = vmax.f32 %v122, 0.0
    %v131 = vmax.f32 %v125, 0.0
    %v132 = vpack.c.bf16 %v129, %v128
    %v133 = vpack.c.bf16 %v131, %v130
    %v134 = vld [vmem:[%s3] sm:$0xf]
    %v135 = vld [vmem:[%s3 + $0x4] sm:$0xf]
    %v136 = vld [vmem:[%s3 + $0x8] sm:$0xf]
    %v137 = vld [vmem:[%s3 + $0xc] sm:$0xf]
    %v138 = vld [vmem:[%s4] sm:$0xff]
    %v139 = vld [vmem:[%s4 + $0x8] sm:$0xff]
    %v140 = vld [vmem:[%s4 + $0x10] sm:$0xff]
    %v141 = vld [vmem:[%s4 + $0x18] sm:$0xff]
    %143 = vset.pattern.permute.xlu0 0
    %144 = vperm.xlu0 %143, %v138
    %v145 = vpop.permute.xlu0 %144
    %148 = vset.pattern.permute.xlu0 0
    %149 = vperm.xlu0 %148, %v139
    %v150 = vpop.permute.xlu0 %149
    %153 = vset.pattern.permute.xlu0 0
    %154 = vperm.xlu0 %153, %v140
    %v155 = vpop.permute.xlu0 %154
    %158 = vset.pattern.permute.xlu0 0
    %159 = vperm.xlu0 %158, %v141
    %v160 = vpop.permute.xlu0 %159
    %v166 = vunpack.c.l.b16 %v134
    %v167 = vunpack.c.l.b16 %v135
    %v168 = vunpack.c.l.b16 %v136
    %v169 = vunpack.c.l.b16 %v137
    %v170 = vpack.c.b16 %v167, %v166
    %v171 = vpack.c.b16 %v169, %v168
    %vm172 = vcmask 261120
    %v174 = vsel %vm172, %v170, 0
    %v177 = vsel %vm172, %v171, 0
    %179 = vmatprep.subr.bf16.mxu0 0
    %180 = vmatpush1.bf16.msra.mxu0 0
    %181 = vmatprep.subr.bf16.mxu0 0
    %182 = vmatpush1.bf16.msra.mxu0 0
    %183 = vmatprep.subr.bf16.mxu0 0
    %184 = vmatpush1.bf16.msra.mxu0 0
    %185 = vmatprep.subr.bf16.mxu0 0
    %186 = vmatpush1.bf16.msra.mxu0 0
    %187 = vmatprep.subr.bf16.mxu0 0
    %188 = vmatpush1.bf16.msra.mxu0 0
    %189 = vmatprep.subr.bf16.mxu0 0
    %190 = vmatpush1.bf16.msra.mxu0 0
    %191 = vmatprep.subr.bf16.mxu0 0
    %192 = vmatpush1.bf16.msra.mxu0 %v133
    %193 = vmatprep.subr.bf16.mxu0 0
    %194 = vmatpush1.bf16.msra.mxu0 %v132
    %195 = vmatprep.subr.bf16.mxu0 0
    %196 = vmatpush2.bf16.msra.mxu0 0
    %197 = vmatprep.subr.bf16.mxu0 0
    %198 = vmatpush2.bf16.msra.mxu0 0
    %199 = vmatprep.subr.bf16.mxu0 0
    %200 = vmatpush2.bf16.msra.mxu0 0
    %201 = vmatprep.subr.bf16.mxu0 0
    %202 = vmatpush2.bf16.msra.mxu0 0
    %203 = vmatprep.subr.bf16.mxu0 0
    %204 = vmatpush2.bf16.msra.mxu0 0
    %205 = vmatprep.subr.bf16.mxu0 0
    %206 = vmatpush2.bf16.msra.mxu0 0
    %207 = vmatprep.subr.bf16.mxu0 0
    %208 = vmatpush2.bf16.msra.mxu0 0
    %209 = vmatprep.subr.bf16.mxu0 0
    %210 = vmatpush2.bf16.msra.mxu0 0
    %211 = vmatprep.mubr.bf16.mxu0 0
    %212 = vmatmul.mubr.bf16.gmra.mxu0 %v174
    %v213 = vpop.f32.mrf.mxu0
    %v214 = vadd.f32 %v145, %v213
    %v215 = vpop.f32.mrf.mxu0
    %v216 = vpop.f32.mrf.mxu0
    %v217 = vadd.f32 %v150, %v216
    %v218 = vpop.f32.mrf.mxu0
    %219 = vmatprep.mubr.bf16.mxu0 0
    %220 = vmatmul.mubr.bf16.gmra.mxu0 %v177
    %v221 = vpop.f32.mrf.mxu0
    %v222 = vadd.f32 %v155, %v221
    %v223 = vpop.f32.mrf.mxu0
    %v224 = vpop.f32.mrf.mxu0
    %v225 = vadd.f32 %v160, %v224
    %v226 = vpop.f32.mrf.mxu0
    %227 = vdwg.mxu0
    %v228 = vmax.f32 %v214, 0.0
    %v229 = vmax.f32 %v217, 0.0
    %v230 = vmax.f32 %v222, 0.0
    %v231 = vmax.f32 %v225, 0.0
    %v232 = vld [vmem:[%s5] sm:$0xff]
    %v233 = vld [vmem:[%s5 + $0x8] sm:$0xff]
    %v234 = vld [vmem:[%s5 + $0x10] sm:$0xff]
    %v235 = vld [vmem:[%s5 + $0x18] sm:$0xff]
    %237 = vset.pattern.permute.xlu0 0
    %238 = vperm.xlu0 %237, %v232
    %v239 = vpop.permute.xlu0 %238
    %242 = vset.pattern.permute.xlu0 0
    %243 = vperm.xlu0 %242, %v233
    %v244 = vpop.permute.xlu0 %243
    %247 = vset.pattern.permute.xlu0 0
    %248 = vperm.xlu0 %247, %v234
    %v249 = vpop.permute.xlu0 %248
    %252 = vset.pattern.permute.xlu0 0
    %253 = vperm.xlu0 %252, %v235
    %v254 = vpop.permute.xlu0 %253
    %v256 = vmul.f32 %v239, %v228
    %v257 = vmul.f32 %v244, %v229
    %v258 = vmul.f32 %v249, %v230
    %v259 = vmul.f32 %v254, %v231
    %vm260 = vcmask 64512
    %v261 = vsel %vm260, %v256, 0.0
    %v262 = vsel %vm260, %v257, 0.0
    %v263 = vadd.f32 %v261, %v262
    %v264 = vsel %vm260, %v258, 0.0
    %v265 = vadd.f32 %v263, %v264
    %v266 = vsel %vm260, %v259, 0.0
    %v267 = vadd.f32 %v265, %v266
    %v268 = vrot.slane %v267, 4
    %v269 = vadd.f32 %v267, %v268
    %v270 = vrot.slane %v269, 2
    %v271 = vadd.f32 %v269, %v270
    %v272 = vrot.slane %v271, 1
    %v273 = vadd.f32 %v271, %v272
    %s274 = sld [smem:[#allocation2]]
    %v275 = vstv %s274
    %v276 = vadd.f32 %v273, %v275
    %v277 = vxor.u32 %v276, 2147483648
    %v278 = vmul.f32 %v277, 1.442695
    %v279 = vpow.pop %v278
    %v280 = vadd.f32 %v279, 1.0
    %v281 = vrcp.pop %v280
    %v282 = vmul.f32 1.0, %v281
    %vm283 = vcmask 57344
    %284 = vst.msk [vmem:[#allocation3] sm:$0x1] %vm283, %v282
    // Predicated region
    $region30: #{tpu_custom_call.1} parent=1 // pred_check
      _
    $region31: #{tpu_custom_call.1} parent=1 // pred_check_branch
      %286 = sbr.rel (0) target = $region33
    $region32: #{tpu_custom_call.1} parent=1 // pred_region
      %s288 = ssub.s32 16, 16
      %289 = vsyncadd [#allocation4], %s288
      %s291 = sshll.u32 [#allocation3], 4
      %s292 = int_to_ptr.vmem [resolvable:$true] %s291
      %294 = dma.vmem_to_hbm [thread:$0]  %s292, 16, %s7, [#allocation4]
    $region33: #{tpu_custom_call.1} parent=1 // pred_fallthru
      _
    // Predicated region
    $region34: #{tpu_custom_call.1} parent=1 // pred_check
      _
    $region35: #{tpu_custom_call.1} parent=1 // pred_check_branch
      %296 = sbr.rel (0) target = $region37
    $region36: #{tpu_custom_call.1} parent=1 // pred_region
      %297 = dma.done [#allocation4], 16
    $region37: #{tpu_custom_call.1} parent=1 // pred_fallthru
      _
    %298 = vsyncpa [#allocation4], 1

</llo_original>
